<compile_context>
chip_gen: v7x
topology: tpu7x:2x2x1
jax: 0.10.0
libtpu: 0.0.40
codegen_flags: <defaults>
</compile_context>

<pallas_src>
import functools

import jax
import jax.numpy as jnp
from jax import lax
from jax.experimental import pallas as pl
from jax.experimental.pallas import tpu as pltpu


# ----------------------------- kernel ---------------------------------------

def _layernorm_kernel(*refs, bias_free, eps):
    if bias_free:
        x_ref, w_ref, o_ref = refs
        b_ref = None
    else:
        x_ref, w_ref, b_ref, o_ref = refs

    # x: (1, C, TW) -- C channels in sublanes, TW spatial positions in lanes
    # w, b: (C, 1)  -- per-channel affine, broadcast across lanes
    x = x_ref[0]
    c = x.shape[0]
    inv_c = jnp.float32(1.0 / c)

    xf = x.astype(jnp.float32)                                   # (C, TW)
    # Single-pass statistics (f32 accumulation), unbiased=False semantics.
    s1 = jnp.sum(xf, axis=0, keepdims=True)                      # (1, TW)
    s2 = jnp.sum(xf * xf, axis=0, keepdims=True)                 # (1, TW)
    mu = s1 * inv_c
    var = s2 * inv_c - mu * mu
    inv = lax.rsqrt(var + jnp.float32(eps))                      # EUP

    w = w_ref[...].astype(jnp.float32)                           # (C, 1)
    scale = inv * w                                              # (C, TW)
    if bias_free:
        # NOTE: Restormer's BiasFree_LayerNorm intentionally uses x (NOT x - mu)
        # in the numerator while var is still computed around the mean.
        # Do not "fix" this in either direction.
        y = xf * scale
    else:
        b = b_ref[...].astype(jnp.float32)                       # (C, 1)
        # (x - mu) * inv * w + b  ==  x*scale + (b - mu*scale); no xc temporary.
        y = xf * scale + (b - mu * scale)

    o_ref[0] = y.astype(o_ref.dtype)


# ----------------------------- wrapper ---------------------------------------

def _pick_spatial_tile(hw, c, itemsize):
    """Byte-budgeted lane tile.

    Target ~1 MiB * itemsize of input per block (so the f32-equivalent temp
    footprint is ~4 MiB regardless of input dtype), rounded down to a multiple
    of 128 lanes, and capped at the 128-rounded spatial extent (cdiv grid
    handles the masked tail).
    """
    target_bytes = (1 << 20) * itemsize
    tw = (target_bytes // (c * itemsize)) // 128 * 128
    tw = max(512, tw)
    hw_pad = -(-hw // 128) * 128
    return int(min(tw, hw_pad))


def layernorm_forward(x_nchw, weight, bias=None, *, bias_free=False, eps=1e-5):
    """Equivalent of LayerNorm(dim, LayerNorm_type).forward on NCHW input."""
    B, C, H, W = x_nchw.shape
    hw = H * W
    itemsize = jnp.dtype(x_nchw.dtype).itemsize

    x3 = x_nchw.reshape(B, C, hw)                      # free reshape, no transpose
    w2 = weight.reshape(C, 1)

    tw = _pick_spatial_tile(hw, C, itemsize)
    grid = (B, pl.cdiv(hw, tw))

    x_spec = pl.BlockSpec((1, C, tw), lambda b, j: (b, 0, j))
    p_spec = pl.BlockSpec((C, 1), lambda b, j: (0, 0))
    out_spec = pl.BlockSpec((1, C, tw), lambda b, j: (b, 0, j))

    kernel = functools.partial(_layernorm_kernel, bias_free=bias_free, eps=eps)

    if bias_free:
        in_specs = [x_spec, p_spec]
        args = (x3, w2)
    else:
        if bias is None:
            bias = jnp.zeros((C,), weight.dtype)
        in_specs = [x_spec, p_spec, p_spec]
        args = (x3, w2, bias.reshape(C, 1))

    cost = pl.CostEstimate(
        flops=8 * B * C * hw,
        transcendentals=B * hw,
        bytes_accessed=2 * B * C * hw * itemsize + 2 * C * itemsize,
    )

    out = pl.pallas_call(
        kernel,
        out_shape=jax.ShapeDtypeStruct((B, C, hw), x_nchw.dtype),
        grid=grid,
        in_specs=in_specs,
        out_specs=out_spec,
        compiler_params=pltpu.CompilerParams(
            dimension_semantics=("parallel", "parallel"),
            vmem_limit_bytes=48 * 1024 * 1024,
        ),
        cost_estimate=cost,
    )(*args)

    return out.reshape(B, C, H, W)


# ----------------------------- reference & test ------------------------------

def _layernorm_ref(x, weight, bias, bias_free, eps=1e-5):
    # Literal translation of the PyTorch module: to_3d -> LN over last dim -> to_4d.
    B, C, H, W = x.shape
    x3 = jnp.transpose(x.reshape(B, C, H * W), (0, 2, 1)).astype(jnp.float32)  # (B, hw, C)
    mu = jnp.mean(x3, axis=-1, keepdims=True)
    var = jnp.mean((x3 - mu) ** 2, axis=-1, keepdims=True)
    if bias_free:
        y = x3 / jnp.sqrt(var + eps) * weight.astype(jnp.float32)
    else:
        y = (x3 - mu) / jnp.sqrt(var + eps) * weight.astype(jnp.float32) \
            + bias.astype(jnp.float32)
    y = jnp.transpose(y, (0, 2, 1)).reshape(B, C, H, W)
    return y.astype(x.dtype)


if __name__ == "__main__":
    key = jax.random.PRNGKey(0)

    # --- test 1: WithBias, divisible hw (2, 4, 16, 16) -----------------------
    B, C, H, W = 2, 4, 16, 16
    kx, kw, kb, key = jax.random.split(key, 4)
    x = jax.random.normal(kx, (B, C, H, W), jnp.float32)
    weight = 1.0 + 0.1 * jax.random.normal(kw, (C,), jnp.float32)
    bias = 0.1 * jax.random.normal(kb, (C,), jnp.float32)

    fwd_wb = jax.jit(functools.partial(layernorm_forward, bias_free=False))
    out_wb = fwd_wb(x, weight, bias)
    jax.block_until_ready(out_wb)
    ref_wb = _layernorm_ref(x, weight, bias, bias_free=False)
    assert out_wb.shape == (B, C, H, W)
    assert jnp.allclose(out_wb, ref_wb, atol=1e-4, rtol=1e-4), "WithBias mismatch"

    # --- test 2: BiasFree, same shape ----------------------------------------
    fwd_bf = jax.jit(functools.partial(layernorm_forward, bias_free=True))
    out_bf = fwd_bf(x, weight)
    jax.block_until_ready(out_bf)
    ref_bf = _layernorm_ref(x, weight, None, bias_free=True)
    assert out_bf.shape == (B, C, H, W)
    assert jnp.allclose(out_bf, ref_bf, atol=1e-4, rtol=1e-4), "BiasFree mismatch"

    # --- test 3: WithBias, non-divisible hw (exercises the masked tail block) -
    B2, C2, H2, W2 = 1, 8, 10, 12          # hw = 120, not a multiple of 128
    kx2, kw2, kb2, key = jax.random.split(key, 4)
    x2 = jax.random.normal(kx2, (B2, C2, H2, W2), jnp.float32)
    weight2 = 1.0 + 0.1 * jax.random.normal(kw2, (C2,), jnp.float32)
    bias2 = 0.1 * jax.random.normal(kb2, (C2,), jnp.float32)

    out2 = jax.jit(functools.partial(layernorm_forward, bias_free=False))(x2, weight2, bias2)
    jax.block_until_ready(out2)
    ref2 = _layernorm_ref(x2, weight2, bias2, bias_free=False)
    assert out2.shape == (B2, C2, H2, W2)
    assert jnp.allclose(out2, ref2, atol=1e-4, rtol=1e-4), "Non-divisible hw mismatch"

    print("KERNEL_OK")
</pallas_src>

<mosaic_0001>
module attributes {stable_mosaic.version = 11 : i64} {
  func.func @_layernorm_kernel(%arg0: i32, %arg1: i32, %arg2: memref<1x4x256xf32, #tpu.memory_space<vmem>>, %arg3: memref<4x1xf32, #tpu.memory_space<vmem>>, %arg4: memref<4x1xf32, #tpu.memory_space<vmem>>, %arg5: memref<1x4x256xf32, #tpu.memory_space<vmem>>) attributes {dimension_semantics = [#tpu.dimension_semantics<parallel>, #tpu.dimension_semantics<parallel>], iteration_bounds = array<i64: 2, 1>, scalar_prefetch = 0 : i64, scratch_operands = 0 : i64, tpu.core_type = #tpu.core_type<tc>, window_params = [{transform_indices = @transform_0, window_bounds = array<i64: 1, 4, 256>}, {pipeline_mode = #tpu.pipeline_mode<synchronous>, transform_indices = @transform_1, window_bounds = array<i64: 4, 1>}, {pipeline_mode = #tpu.pipeline_mode<synchronous>, transform_indices = @transform_2, window_bounds = array<i64: 4, 1>}, {transform_indices = @transform_3, window_bounds = array<i64: 1, 4, 256>}]} {
    %c0 = arith.constant 0 : index
    %c0_0 = arith.constant 0 : index
    %c0_1 = arith.constant 0 : index
    %0 = vector.load %arg2[%c0, %c0_0, %c0_1] : memref<1x4x256xf32, #tpu.memory_space<vmem>>, vector<1x4x256xf32>
    %1 = vector.shape_cast %0 : vector<1x4x256xf32> to vector<4x256xf32>
    %cst = arith.constant dense<0.000000e+00> : vector<256xf32>
    %2 = vector.multi_reduction <add>, %1, %cst [0] : vector<4x256xf32> to vector<256xf32>
    %3 = vector.shape_cast %2 : vector<256xf32> to vector<1x256xf32>
    %4 = arith.mulf %1, %1 : vector<4x256xf32>
    %cst_2 = arith.constant dense<0.000000e+00> : vector<256xf32>
    %5 = vector.multi_reduction <add>, %4, %cst_2 [0] : vector<4x256xf32> to vector<256xf32>
    %6 = vector.shape_cast %5 : vector<256xf32> to vector<1x256xf32>
    %cst_3 = arith.constant 2.500000e-01 : f32
    %7 = vector.broadcast %cst_3 : f32 to vector<1x256xf32>
    %8 = arith.mulf %3, %7 : vector<1x256xf32>
    %cst_4 = arith.constant 2.500000e-01 : f32
    %9 = vector.broadcast %cst_4 : f32 to vector<1x256xf32>
    %10 = arith.mulf %6, %9 : vector<1x256xf32>
    %11 = arith.mulf %8, %8 : vector<1x256xf32>
    %12 = arith.subf %10, %11 : vector<1x256xf32>
    %cst_5 = arith.constant 9.99999974E-6 : f32
    %13 = vector.broadcast %cst_5 : f32 to vector<1x256xf32>
    %14 = arith.addf %12, %13 : vector<1x256xf32>
    %15 = math.rsqrt %14 : vector<1x256xf32>
    %c0_6 = arith.constant 0 : index
    %c0_7 = arith.constant 0 : index
    %16 = vector.load %arg3[%c0_6, %c0_7] : memref<4x1xf32, #tpu.memory_space<vmem>>, vector<4x1xf32>
    %17 = vector.broadcast %15 : vector<1x256xf32> to vector<4x256xf32>
    %18 = vector.broadcast %16 : vector<4x1xf32> to vector<4x256xf32>
    %19 = arith.mulf %17, %18 : vector<4x256xf32>
    %c0_8 = arith.constant 0 : index
    %c0_9 = arith.constant 0 : index
    %20 = vector.load %arg4[%c0_8, %c0_9] : memref<4x1xf32, #tpu.memory_space<vmem>>, vector<4x1xf32>
    %21 = arith.mulf %1, %19 : vector<4x256xf32>
    %22 = vector.broadcast %8 : vector<1x256xf32> to vector<4x256xf32>
    %23 = arith.mulf %22, %19 : vector<4x256xf32>
    %24 = vector.broadcast %20 : vector<4x1xf32> to vector<4x256xf32>
    %25 = arith.subf %24, %23 : vector<4x256xf32>
    %26 = arith.addf %21, %25 : vector<4x256xf32>
    %c0_10 = arith.constant 0 : index
    %c0_11 = arith.constant 0 : index
    %c0_12 = arith.constant 0 : index
    %27 = vector.load %arg5[%c0_10, %c0_11, %c0_12] : memref<1x4x256xf32, #tpu.memory_space<vmem>>, vector<1x4x256xf32>
    %28 = vector.shape_cast %27 : vector<1x4x256xf32> to vector<4x256xf32>
    %29 = vector.shape_cast %26 : vector<4x256xf32> to vector<1x4x256xf32>
    tpu.vector_store %arg5[%c0_10, %c0_11, %c0_12], %29 {strides = array<i32>} : memref<1x4x256xf32, #tpu.memory_space<vmem>>, vector<1x4x256xf32>,
    return
  }
  func.func @transform_0(%arg0: i32, %arg1: i32) -> (i32, i32, i32) {
    %c0_i32 = arith.constant 0 : i32
    %c0_i32_0 = arith.constant 0 : i32
    return %arg0, %c0_i32, %arg1 : i32, i32, i32
  }
  func.func @transform_1(%arg0: i32, %arg1: i32) -> (i32, i32) {
    %c0_i32 = arith.constant 0 : i32
    %c0_i32_0 = arith.constant 0 : i32
    %c0_i32_1 = arith.constant 0 : i32
    return %c0_i32, %c0_i32_0 : i32, i32
  }
  func.func @transform_2(%arg0: i32, %arg1: i32) -> (i32, i32) {
    %c0_i32 = arith.constant 0 : i32
    %c0_i32_0 = arith.constant 0 : i32
    %c0_i32_1 = arith.constant 0 : i32
    return %c0_i32, %c0_i32_0 : i32, i32
  }
  func.func @transform_3(%arg0: i32, %arg1: i32) -> (i32, i32, i32) {
    %c0_i32 = arith.constant 0 : i32
    %c0_i32_0 = arith.constant 0 : i32
    return %arg0, %c0_i32, %arg1 : i32, i32, i32
  }
}

</mosaic_0001>

<llo_original>
// kernel: layernorm_forward.1
$region0: #{layernorm_forward.1}
  #allocation0 [shape = 'u32[]', space=smem, size = 0x4, offset = 0x4, fixed_abs, tag = 'smem constant byte address 0x4 - core index']
  #allocation1 [shape = 'u32[144,128]{1,0:T(1,128)}', space=vmem, size = 0x12000, scoped, tag = 'internal scratch']
  %s0 = inlined_call_operand.vmem [shape: f32[2,4,256], index: 0, kind: input, shape index: {}]
  %s1 = inlined_call_operand.vmem [shape: f32[4,1], index: 1, kind: input, shape index: {}]
  %s2 = inlined_call_operand.vmem [shape: f32[4,1], index: 2, kind: input, shape index: {}]
  %s3 = inlined_call_operand.vmem [shape: f32[2,4,256], index: 3, kind: output, shape index: {}]
  %s4 = sld [smem:[#allocation0]]
  $region45: #{layernorm_forward.1} parent=0
    _
  %s6 = ssub.s32 1, %s4
  %s7 = scalar_select 0, %s6, %s4
  loop: start=0, step=1, limit=4
  $region2: #{layernorm_forward.1} parent=0 // loop_pre_header
    _
  $region3: #{layernorm_forward.1} parent=0 // loop_header
    %s9 = sphi 0, %s13
    %p10 = scmp.ge.s32.totalorder %s9, 4
    %s16 = sphi 0, %s28
    %s17 = sphi 0, %s24
    %s18 = sphi 0, %s16
    %s19 = sphi 0, %s17
    %s20 = sphi 0, %s18
    %s21 = sphi 0, %s19
    %s33 = sphi 0, %s35
    %s36 = sphi 0, %s33
    %s37 = sphi 0, %s36
    %s53 = sphi 0, %s37
    %s57 = sphi 0, %s57
    %s59 = sphi 0, %s57
    %s60 = sphi 0, %s59
    %s74 = sphi 0, %s60
    %s78 = sphi 0, %s78
    %s80 = sphi 0, %s78
    %s81 = sphi 0, %s80
    %s95 = sphi 0, %s81
    %s103 = sphi 0, %s105
    %s106 = sphi 0, %s103
    %s107 = sphi 0, %s106
    %s123 = sphi 0, %s107
  $region4: #{layernorm_forward.1} parent=0 // loop_header_branch
    %12 = sbr.rel (%p10) target = $region8
  $region5: #{layernorm_forward.1} parent=0 // loop_body
    %s14 = ssub.s32 %s9, 1
    %s15 = ssub.s32 %s9, 2
    %s22 = sadd.s32 1, %s17
    %p23 = scmp.ge.s32.totalorder %s22, 1
    %s24 = scalar_select %p23, 0, %s22
    %s25 = sadd.s32 1, %s16
    %s26 = scalar_select %p23, %s25, %s16
    %p27 = scmp.ge.s32.totalorder %s26, 2
    %s28 = scalar_select %p27, 0, %s26
    %s29 = ssub.s32 %s16, %s28
    %s30 = ssub.s32 %s17, %s24
    %s31 = sor.u32 %s29, %s30
    %p32 = scmp.eq.s32.totalorder %s31, 0
    %s34 = sadd.s32 %s33, 1
    %s35 = scalar_select %p32, %s33, %s34
    %p38 = pneg %p32
    %p39 = scmp.eq.s32.totalorder %s9, 1
    %p40 = por %p38, %p39
    %p41 = scmp.ne.s32.totalorder %s33, %s36
    %p42 = scmp.eq.s32.totalorder %s9, 0
    %p43 = por %p41, %p42
    %p44 = scmp.ne.s32.totalorder %s33, %s36
    %p45 = scmp.eq.s32.totalorder %s14, 1
    %p46 = por %p44, %p45
    %p47 = scmp.ne.s32.totalorder %s36, %s37
    %p48 = scmp.eq.s32.totalorder %s14, 0
    %p49 = por %p47, %p48
    %p50 = scmp.ne.s32.totalorder %s36, %s37
    %p51 = scmp.eq.s32.totalorder %s15, 1
    %p52 = por %p50, %p51
    %p54 = scmp.ne.s32.totalorder %s37, %s53
    %p55 = scmp.eq.s32.totalorder %s15, 0
    %p56 = por %p54, %p55
    %s58 = sadd.s32 %s57, 1
    %p61 = scmp.eq.s32.totalorder %s9, 1
    %p62 = scmp.ne.s32.totalorder %s57, %s59
    %p63 = scmp.eq.s32.totalorder %s9, 0
    %p64 = por %p62, %p63
    %p65 = scmp.ne.s32.totalorder %s57, %s59
    %p66 = scmp.eq.s32.totalorder %s14, 1
    %p67 = por %p65, %p66
    %p68 = scmp.ne.s32.totalorder %s59, %s60
    %p69 = scmp.eq.s32.totalorder %s14, 0
    %p70 = por %p68, %p69
    %p71 = scmp.ne.s32.totalorder %s59, %s60
    %p72 = scmp.eq.s32.totalorder %s15, 1
    %p73 = por %p71, %p72
    %p75 = scmp.ne.s32.totalorder %s60, %s74
    %p76 = scmp.eq.s32.totalorder %s15, 0
    %p77 = por %p75, %p76
    %s79 = sadd.s32 %s78, 1
    %p82 = scmp.eq.s32.totalorder %s9, 1
    %p83 = scmp.ne.s32.totalorder %s78, %s80
    %p84 = scmp.eq.s32.totalorder %s9, 0
    %p85 = por %p83, %p84
    %p86 = scmp.ne.s32.totalorder %s78, %s80
    %p87 = scmp.eq.s32.totalorder %s14, 1
    %p88 = por %p86, %p87
    %p89 = scmp.ne.s32.totalorder %s80, %s81
    %p90 = scmp.eq.s32.totalorder %s14, 0
    %p91 = por %p89, %p90
    %p92 = scmp.ne.s32.totalorder %s80, %s81
    %p93 = scmp.eq.s32.totalorder %s15, 1
    %p94 = por %p92, %p93
    %p96 = scmp.ne.s32.totalorder %s81, %s95
    %p97 = scmp.eq.s32.totalorder %s15, 0
    %p98 = por %p96, %p97
    %s99 = ssub.s32 %s16, %s28
    %s100 = ssub.s32 %s17, %s24
    %s101 = sor.u32 %s99, %s100
    %p102 = scmp.eq.s32.totalorder %s101, 0
    %s104 = sadd.s32 %s103, 1
    %s105 = scalar_select %p102, %s103, %s104
    %p108 = pneg %p102
    %p109 = scmp.eq.s32.totalorder %s9, 1
    %p110 = por %p108, %p109
    %p111 = scmp.ne.s32.totalorder %s103, %s106
    %p112 = scmp.eq.s32.totalorder %s9, 0
    %p113 = por %p111, %p112
    %p114 = scmp.ne.s32.totalorder %s103, %s106
    %p115 = scmp.eq.s32.totalorder %s14, 1
    %p116 = por %p114, %p115
    %p117 = scmp.ne.s32.totalorder %s106, %s107
    %p118 = scmp.eq.s32.totalorder %s14, 0
    %p119 = por %p117, %p118
    %p120 = scmp.ne.s32.totalorder %s106, %s107
    %p121 = scmp.eq.s32.totalorder %s15, 1
    %p122 = por %p120, %p121
    %p124 = scmp.ne.s32.totalorder %s107, %s123
    %p125 = scmp.eq.s32.totalorder %s15, 0
    %p126 = por %p124, %p125
    %p127 = scmp.le.s32.totalorder 1, %s9
    %p128 = scmp.lt.s32.totalorder %s9, 3
    %p129 = pnand %p127, %p128
    %p130 = pneg %p129
    // Predicated region
    $region9: #{layernorm_forward.1} parent=5 // pred_check
      _
    $region10: #{layernorm_forward.1} parent=5 // pred_check_branch
      %132 = sbr.rel (%p129) target = $region12
    $region11: #{layernorm_forward.1} parent=5 // pred_region
      %s133 = ssub.s32 %s9, 1
      // Predicated region
      $region13: #{layernorm_forward.1} parent=11 // pred_check
        %p134 = pneg %p70
      $region14: #{layernorm_forward.1} parent=11 // pred_check_branch
        %136 = sbr.rel (%p134) target = $region16
      $region15: #{layernorm_forward.1} parent=11 // pred_region
        _
      $region16: #{layernorm_forward.1} parent=11 // pred_fallthru
        _
      // Predicated region
      $region17: #{layernorm_forward.1} parent=11 // pred_check
        %p137 = pneg %p91
      $region18: #{layernorm_forward.1} parent=11 // pred_check_branch
        %139 = sbr.rel (%p137) target = $region20
      $region19: #{layernorm_forward.1} parent=11 // pred_region
        _
      $region20: #{layernorm_forward.1} parent=11 // pred_fallthru
        _
    $region12: #{layernorm_forward.1} parent=5 // pred_fallthru
      _
    %p140 = scmp.lt.s32.totalorder %s9, 2
    // Predicated region
    $region21: #{layernorm_forward.1} parent=5 // pred_check
      %p141 = pneg %p140
    $region22: #{layernorm_forward.1} parent=5 // pred_check_branch
      %143 = sbr.rel (%p141) target = $region24
    $region23: #{layernorm_forward.1} parent=5 // pred_region
      // Predicated region
      $region25: #{layernorm_forward.1} parent=23 // pred_check
        %p144 = pneg %p43
      $region26: #{layernorm_forward.1} parent=23 // pred_check_branch
        %146 = sbr.rel (%p144) target = $region28
      $region27: #{layernorm_forward.1} parent=23 // pred_region
        %s147 = smul.u32 2, %s17
        %p148 = scmp.lt.s32.totalorder %s16, 1
        %s149 = scalar_select %p148, %s16, 1
        %p150 = scmp.lt.s32.totalorder %s147, 1
        %s151 = scalar_select %p150, %s147, 1
        %s152 = smul.addr %s149, 2
        %s153 = sadd.s32 %s151, %s152
        %s154 = smul.addr %s153, 4
        %s155 = scalar_lea.vmem %s0, %s154
        %s156 = smul.u32 2, %s17
      $region28: #{layernorm_forward.1} parent=23 // pred_fallthru
        _
    $region24: #{layernorm_forward.1} parent=5 // pred_fallthru
      _
    %p157 = scmp.le.s32.totalorder 1, %s9
    %p158 = scmp.lt.s32.totalorder %s9, 3
    %p159 = pnand %p157, %p158
    %p160 = pneg %p159
    // Predicated region
    $region29: #{layernorm_forward.1} parent=5 // pred_check
      _
    $region30: #{layernorm_forward.1} parent=5 // pred_check_branch
      %162 = sbr.rel (%p159) target = $region32
    $region31: #{layernorm_forward.1} parent=5 // pred_region
      %s163 = ssub.s32 %s9, 1
      %s164 = smul.u32 2, %s19
      %p165 = scmp.lt.s32.totalorder %s18, 1
      %s166 = scalar_select %p165, %s18, 1
      %p167 = scmp.lt.s32.totalorder %s164, 1
      %s168 = scalar_select %p167, %s164, 1
      %s169 = smul.addr %s166, 2
      %s170 = sadd.s32 %s168, %s169
      %s171 = smul.addr %s170, 4
      %s172 = scalar_lea.vmem %s0, %s171
      %p173 = pneg %p49
      %p174 = pneg %p46
      %p175 = pneg %p70
      %p176 = pneg %p67
      %p177 = pneg %p91
      %p178 = pneg %p88
      %p179 = pneg %p119
      %p180 = pneg %p116
      %s181 = smul.u32 2, %s19
      %p182 = scmp.lt.s32.totalorder %s18, 1
      %s183 = scalar_select %p182, %s18, 1
      %p184 = scmp.lt.s32.totalorder %s181, 1
      %s185 = scalar_select %p184, %s181, 1
      %s186 = smul.addr %s183, 2
      %s187 = sadd.s32 %s185, %s186
      %s188 = smul.addr %s187, 4
      %s189 = scalar_lea.vmem %s3, %s188
      %s190 = smul.u32 2, %s19
      %p191 = scmp.lt.s32.totalorder %s18, 1
      %s192 = scalar_select %p191, %s18, 1
      %p193 = scmp.lt.s32.totalorder %s190, 1
      %s194 = scalar_select %p193, %s190, 1
      %s195 = smul.addr %s192, 2
      %s196 = sadd.s32 %s194, %s195
      %s197 = smul.addr %s196, 4
      %s198 = scalar_lea.vmem %s0, %s197
      %s199 = smul.u32 2, %s19
      %s200 = smul.u32 2, %s19
      %p201 = scmp.lt.s32.totalorder %s18, 1
      %s202 = scalar_select %p201, %s18, 1
      %p203 = scmp.lt.s32.totalorder %s200, 1
      %s204 = scalar_select %p203, %s200, 1
      %s205 = smul.addr %s202, 2
      %s206 = sadd.s32 %s204, %s205
      %s207 = smul.addr %s206, 4
      %s208 = scalar_lea.vmem %s3, %s207
      %s209 = smul.u32 2, %s19
      %v210 = vld [vmem:[%s198] sm:$0xff]
      %v212 = vcombine.high %v210, %v210
      %vm214 = vcmask 1043456
      %v215 = vsel %vm214, %v210, 0.0
      %v216 = vrot.slane %v215, 4
      %v217 = vadd.f32 %v215, %v216
      %v218 = vrot.slane %v217, 2
      %v219 = vadd.f32 %v217, %v218
      %v220 = vrot.slane %v219, 1
      %v221 = vadd.f32 %v219, %v220
      %v222 = vsel %vm214, %v212, 0.0
      %v223 = vrot.slane %v222, 4
      %v224 = vadd.f32 %v222, %v223
      %v225 = vrot.slane %v224, 2
      %v226 = vadd.f32 %v224, %v225
      %v227 = vrot.slane %v226, 1
      %v228 = vadd.f32 %v226, %v227
      %v229 = vmul.f32 %v210, %v210
      %v231 = vcombine.high %v229, %v229
      %v233 = vsel %vm214, %v229, 0.0
      %v234 = vrot.slane %v233, 4
      %v235 = vadd.f32 %v233, %v234
      %v236 = vrot.slane %v235, 2
      %v237 = vadd.f32 %v235, %v236
      %v238 = vrot.slane %v237, 1
      %v239 = vadd.f32 %v237, %v238
      %v240 = vsel %vm214, %v231, 0.0
      %v241 = vrot.slane %v240, 4
      %v242 = vadd.f32 %v240, %v241
      %v243 = vrot.slane %v242, 2
      %v244 = vadd.f32 %v242, %v243
      %v245 = vrot.slane %v244, 1
      %v246 = vadd.f32 %v244, %v245
      %v247 = vmul.f32 %v221, 0.25
      %v248 = vmul.f32 %v228, 0.25
      %v249 = vmul.f32 %v239, 0.25
      %v250 = vmul.f32 %v246, 0.25
      %v251 = vmul.f32 %v247, %v247
      %v252 = vmul.f32 %v248, %v248
      %v253 = vsub.f32 %v249, %v251
      %v254 = vsub.f32 %v250, %v252
      %v255 = vadd.f32 %v253, 1e-05
      %v256 = vadd.f32 %v254, 1e-05
      %v257 = vrsqrt.pop %v255
      %v258 = vrsqrt.pop %v256
      %v259 = vld [vmem:[%s1] sm:$0xf]
      %261 = vset.pattern.permute.xlu0 0
      %262 = vperm.xlu0 %261, %v259
      %v263 = vpop.permute.xlu0 %262
      %v265 = vmul.f32 %v257, %v263
      %v266 = vmul.f32 %v258, %v263
      %v267 = vld [vmem:[%s2] sm:$0xf]
      %v270 = vcombine.low %v265, %v266
      %v272 = vmul.f32 %v210, %v270
      %v273 = vmul.f32 %v247, %v265
      %v274 = vmul.f32 %v248, %v266
      %276 = vset.pattern.permute.xlu0 0
      %277 = vperm.xlu0 %276, %v267
      %v278 = vpop.permute.xlu0 %277
      %v280 = vsub.f32 %v278, %v273
      %v281 = vsub.f32 %v278, %v274
      %v284 = vcombine.low %v280, %v281
      %v286 = vadd.f32 %v272, %v284
      %287 = vst [vmem:[%s208] sm:$0xff] %v286
      %s288 = smul.u32 2, %s19
      %p289 = scmp.lt.s32.totalorder %s18, 1
      %s290 = scalar_select %p289, %s18, 1
      %p291 = scmp.lt.s32.totalorder %s288, 1
      %s292 = scalar_select %p291, %s288, 1
      %s293 = smul.addr %s290, 2
      %s294 = sadd.s32 %s292, %s293
      %s295 = smul.addr %s294, 4
      %s296 = scalar_lea.vmem %s3, %s295
      // Predicated region
      $region33: #{layernorm_forward.1} parent=31 // pred_check
        %p297 = pneg %p116
      $region34: #{layernorm_forward.1} parent=31 // pred_check_branch
        %299 = sbr.rel (%p297) target = $region36
      $region35: #{layernorm_forward.1} parent=31 // pred_region
        %s300 = smul.u32 2, %s19
      $region36: #{layernorm_forward.1} parent=31 // pred_fallthru
        _
    $region32: #{layernorm_forward.1} parent=5 // pred_fallthru
      _
    %p301 = scmp.le.s32.totalorder 2, %s9
    // Predicated region
    $region37: #{layernorm_forward.1} parent=5 // pred_check
      %p302 = pneg %p301
    $region38: #{layernorm_forward.1} parent=5 // pred_check_branch
      %304 = sbr.rel (%p302) target = $region40
    $region39: #{layernorm_forward.1} parent=5 // pred_region
      %s305 = ssub.s32 %s9, 2
      // Predicated region
      $region41: #{layernorm_forward.1} parent=39 // pred_check
        %p306 = pneg %p122
      $region42: #{layernorm_forward.1} parent=39 // pred_check_branch
        %308 = sbr.rel (%p306) target = $region44
      $region43: #{layernorm_forward.1} parent=39 // pred_region
        %s309 = smul.u32 2, %s21
        %p310 = scmp.lt.s32.totalorder %s20, 1
        %s311 = scalar_select %p310, %s20, 1
        %p312 = scmp.lt.s32.totalorder %s309, 1
        %s313 = scalar_select %p312, %s309, 1
        %s314 = smul.addr %s311, 2
        %s315 = sadd.s32 %s313, %s314
        %s316 = smul.addr %s315, 4
        %s317 = scalar_lea.vmem %s3, %s316
      $region44: #{layernorm_forward.1} parent=39 // pred_fallthru
        _
    $region40: #{layernorm_forward.1} parent=5 // pred_fallthru
      _
  $region6: #{layernorm_forward.1} parent=0 // loop_footer
    %s13 = sadd.s32 1, %s9
  $region7: #{layernorm_forward.1} parent=0 // loop_footer_branch
    %8 = sbr.rel target = $region3
  $region8: #{layernorm_forward.1} parent=0 // loop_exit
    _

</llo_original>
